<compile_context>
chip_gen: v7x
topology: tpu7x:2x2x1
jax: 0.10.0
libtpu: 0.0.40
codegen_flags: <defaults>
</compile_context>

<pallas_src>
import functools

import jax
import jax.numpy as jnp
from jax import lax
from jax.experimental import pallas as pl
from jax.experimental.pallas import tpu as pltpu


def _round_up(n, m):
    return ((n + m - 1) // m) * m


def _tpu_config():
    """Per-generation precision / tiling config (conservative fallback = f32)."""
    try:
        kind = jax.devices()[0].device_kind.lower()
    except Exception:
        kind = ""
    cfg = {
        "act_dtype": jnp.float32,   # dtype of the tanh activations (EUP/VPU)
        "mxu_dtype": jnp.float32,   # dtype fed to the MXU dots (f32 accumulate)
        "num_cores": 1,             # TensorCores sharing the parallel batch axis
        "default_tile": 4096,       # default lane tile over the batch
    }
    if ("v5 lite" in kind) or ("v5e" in kind) or ("v5lite" in kind):
        # v5e: MXU accepts bf16, but VPU/EUP have no bf16 -> keep activations f32.
        cfg["mxu_dtype"] = jnp.bfloat16
    elif "v6" in kind:
        # v6e: bf16 EUP runs tanh ~2x faster; bf16 MXU operands.
        cfg["act_dtype"] = jnp.bfloat16
        cfg["mxu_dtype"] = jnp.bfloat16
    elif "7" in kind:
        # v7x: bf16 everywhere; 2 TensorCores -> keep >= 2 parallel grid steps.
        cfg["act_dtype"] = jnp.bfloat16
        cfg["mxu_dtype"] = jnp.bfloat16
        cfg["num_cores"] = 2
    return cfg


def _ppo_critic_kernel(x_ref, w1_ref, w2_ref, wb_ref, o_ref, *,
                       act_dtype, mxu_dtype):
    """One batch tile of the critic MLP; batch lives on the lane axis after L1.

    x_ref  : [TILE_B, S]  states in their natural [batch, feature] layout
    w1_ref : [H, S]       PyTorch Linear1 weight ([out, in], used directly)
    w2_ref : [H, H]       PyTorch Linear2 weight
    wb_ref : [H, 4]       col0=b1, col1=b2, col2=w3 (as a column), wb[0,3]=b3
    o_ref  : [1, TILE_B]  value estimates for this tile (lane-dense store)
    """
    x = x_ref[...].astype(mxu_dtype)                       # [TB, S]
    b1 = wb_ref[:, 0:1]                                    # [H, 1] f32
    b2 = wb_ref[:, 1:2]
    w3 = wb_ref[:, 2:3]
    b3 = wb_ref[0:1, 3:4]                                  # [1, 1]

    # Layer 1: contract the minor feature axis of both operands:
    #   [H, S] x [TILE_B, S] -> [H, TILE_B]   (MXU, f32 accumulate)
    # Keeps x in its natural HBM layout (no wrapper transpose) and lands the
    # batch on the lane axis for the rest of the network.
    z1 = lax.dot_general(
        w1_ref[...].astype(mxu_dtype), x,
        (((1,), (1,)), ((), ())),
        preferred_element_type=jnp.float32,
    )
    h1 = jnp.tanh((z1 + b1).astype(act_dtype))             # EUP; bf16 on v6e/v7x

    # Layer 2: [H, H] @ [H, TILE_B] -> [H, TILE_B]
    z2 = jnp.dot(w2_ref[...].astype(mxu_dtype), h1.astype(mxu_dtype),
                 preferred_element_type=jnp.float32)
    h2 = jnp.tanh((z2 + b2).astype(act_dtype))

    # Value head (N=1): VPU multiply + sublane reduction beats a degenerate
    # [*,64] x [64,1] MXU matmul.  Kept in f32 on every generation.
    v = jnp.sum(h2.astype(jnp.float32) * w3, axis=0, keepdims=True) + b3
    o_ref[...] = v.astype(o_ref.dtype)


def ppo_critic_forward(x, packed_params, *, tile_b=None, precision=None):
    """x: [B, state_dim] -> [B, 1] float32 (matches PyTorch PPOCritic.forward).

    precision: None   -> bf16/f32 chosen per detected TPU generation
               "f32"  -> force float32 everywhere (strictest numerics)
               "bf16" -> force bf16 tanh + bf16 MXU operands
    """
    w1, w2, wb = packed_params
    B, S = x.shape
    H = w1.shape[0]

    cfg = _tpu_config()
    if precision == "f32":
        act_dtype = mxu_dtype = jnp.float32
    elif precision == "bf16":
        act_dtype = mxu_dtype = jnp.bfloat16
    else:
        act_dtype, mxu_dtype = cfg["act_dtype"], cfg["mxu_dtype"]

    # Batch tile: multiple of 128 lanes, big enough to amortize the ~0.35us
    # per-grid-step overhead, capped at one tile over the (128-rounded) batch.
    # (x tile inflates to 128 lanes in VMEM: (4096,8)f32 -> ~2 MiB/buffer; the
    #  [64,TILE_B] intermediates are ~1 MiB each -> well under the 32 MiB limit.)
    if tile_b is None:
        tile_b = cfg["default_tile"]
    tile_b = max(128, min(_round_up(int(tile_b), 128), _round_up(B, 128)))
    # v7x: cap the tile so the parallel batch axis has >= num_cores steps,
    # otherwise one TensorCore sits idle.
    if cfg["num_cores"] > 1 and B > 128:
        tile_b = min(tile_b, _round_up(pl.cdiv(B, cfg["num_cores"]), 128))
    grid = (pl.cdiv(B, tile_b),)

    kernel = functools.partial(_ppo_critic_kernel,
                               act_dtype=act_dtype, mxu_dtype=mxu_dtype)

    flops = 2 * B * (S * H + H * H + H)
    transcendentals = 2 * H * B
    bytes_accessed = int(x.dtype.itemsize) * B * S + 4 * (B + H * S + H * H + H * 4)

    out = pl.pallas_call(
        kernel,
        out_shape=jax.ShapeDtypeStruct((1, B), jnp.float32),
        grid=grid,
        in_specs=[
            # x tiles march along the batch (sublane) axis in natural layout;
            # partial trailing blocks only feed output columns that are dropped.
            pl.BlockSpec((tile_b, S), lambda i: (i, 0)),
            # Weights / packed bias+w3 slab: constant block index -> DMA'd once,
            # resident in VMEM across all grid steps.
            pl.BlockSpec((H, S), lambda i: (0, 0)),
            pl.BlockSpec((H, H), lambda i: (0, 0)),
            pl.BlockSpec((H, 4), lambda i: (0, 0)),
        ],
        out_specs=pl.BlockSpec((1, tile_b), lambda i: (0, i)),
        compiler_params=pltpu.CompilerParams(
            dimension_semantics=("parallel",),
        ),
        cost_estimate=pl.CostEstimate(
            flops=flops,
            transcendentals=transcendentals,
            bytes_accessed=bytes_accessed,
        ),
    )(x, w1, w2, wb)

    return out[0, :].reshape(B, 1)


def init_params(key, state_dim, hidden=64):
    """PyTorch-style Linear params: W [out, in], b [out], U(-1/sqrt(fan_in), +)."""
    ks = jax.random.split(key, 6)

    def uniform(k, shape, fan_in):
        bound = 1.0 / jnp.sqrt(jnp.float32(fan_in))
        return jax.random.uniform(k, shape, jnp.float32, -bound, bound)

    w1 = uniform(ks[0], (hidden, state_dim), state_dim)
    b1 = uniform(ks[1], (hidden,), state_dim)
    w2 = uniform(ks[2], (hidden, hidden), hidden)
    b2 = uniform(ks[3], (hidden,), hidden)
    w3 = uniform(ks[4], (1, hidden), hidden)
    b3 = uniform(ks[5], (1,), hidden)
    return (w1, b1, w2, b2, w3, b3)


def pack_params(torch_params):
    """Repack PyTorch-layout params into the kernel's 3-argument layout."""
    w1, b1, w2, b2, w3, b3 = torch_params
    hidden = w1.shape[0]
    wb = jnp.zeros((hidden, 4), jnp.float32)
    wb = (wb.at[:, 0].set(b1)
            .at[:, 1].set(b2)
            .at[:, 2].set(w3.reshape(hidden))
            .at[0, 3].set(b3[0]))
    return (w1.astype(jnp.float32), w2.astype(jnp.float32), wb)


def reference_forward(x, torch_params):
    w1, b1, w2, b2, w3, b3 = torch_params
    h = jnp.tanh(x @ w1.T + b1)
    h = jnp.tanh(h @ w2.T + b2)
    return h @ w3.T + b3


if __name__ == "__main__":
    key = jax.random.PRNGKey(0)
    k_x, k_x2, k_p = jax.random.split(key, 3)

    STATE_DIM = 8   # LunarLander-v2 observation dimension
    torch_params = init_params(k_p, STATE_DIM)
    packed = pack_params(torch_params)

    # --- forced-f32 path: strict numerical check against the reference -------
    B = 8
    x = jax.random.normal(k_x, (B, STATE_DIM), jnp.float32)
    out = jax.block_until_ready(ppo_critic_forward(x, packed, precision="f32"))
    ref = reference_forward(x, torch_params)
    assert out.shape == (B, 1)
    assert jnp.allclose(out, ref, atol=1e-5, rtol=1e-5), "f32 small-batch mismatch"

    # Larger, non-multiple-of-tile batch: exercises grid > 1 and partial blocks.
    B2 = 300
    x2 = jax.random.normal(k_x2, (B2, STATE_DIM), jnp.float32)
    out2 = jax.block_until_ready(
        ppo_critic_forward(x2, packed, tile_b=128, precision="f32"))
    ref2 = reference_forward(x2, torch_params)
    assert out2.shape == (B2, 1)
    assert jnp.allclose(out2, ref2, atol=1e-5, rtol=1e-5), "f32 large-batch mismatch"

    # --- device-tuned path (bf16 tanh / MXU where the generation supports it) -
    out3 = jax.block_until_ready(ppo_critic_forward(x2, packed))
    assert out3.shape == (B2, 1)
    assert jnp.allclose(out3, ref2, atol=5e-2, rtol=5e-2), "auto-precision mismatch"

    print("KERNEL_OK")
</pallas_src>

<mosaic_0001>
module attributes {stable_mosaic.version = 11 : i64} {
  func.func @_ppo_critic_kernel(%arg0: i32, %arg1: memref<128x8xf32, #tpu.memory_space<vmem>>, %arg2: memref<64x8xf32, #tpu.memory_space<vmem>>, %arg3: memref<64x64xf32, #tpu.memory_space<vmem>>, %arg4: memref<64x4xf32, #tpu.memory_space<vmem>>, %arg5: memref<1x128xf32, #tpu.memory_space<vmem>>) attributes {dimension_semantics = [#tpu.dimension_semantics<parallel>], iteration_bounds = array<i64: 1>, scalar_prefetch = 0 : i64, scratch_operands = 0 : i64, tpu.core_type = #tpu.core_type<tc>, window_params = [{transform_indices = @transform_0, window_bounds = array<i64: 128, 8>}, {pipeline_mode = #tpu.pipeline_mode<synchronous>, transform_indices = @transform_1, window_bounds = array<i64: 64, 8>}, {pipeline_mode = #tpu.pipeline_mode<synchronous>, transform_indices = @transform_2, window_bounds = array<i64: 64, 64>}, {pipeline_mode = #tpu.pipeline_mode<synchronous>, transform_indices = @transform_3, window_bounds = array<i64: 64, 4>}, {transform_indices = @transform_4, window_bounds = array<i64: 1, 128>}]} {
    %c0 = arith.constant 0 : index
    %c0_0 = arith.constant 0 : index
    %0 = vector.load %arg1[%c0, %c0_0] : memref<128x8xf32, #tpu.memory_space<vmem>>, vector<128x8xf32>
    %c0_1 = arith.constant 0 : index
    %c0_2 = arith.constant 0 : index
    %1 = vector.load %arg4[%c0_1, %c0_2] : memref<64x4xf32, #tpu.memory_space<vmem>>, vector<64x1xf32>
    %c0_3 = arith.constant 0 : index
    %c1 = arith.constant 1 : index
    %2 = vector.load %arg4[%c0_3, %c1] : memref<64x4xf32, #tpu.memory_space<vmem>>, vector<64x1xf32>
    %c0_4 = arith.constant 0 : index
    %c2 = arith.constant 2 : index
    %3 = vector.load %arg4[%c0_4, %c2] : memref<64x4xf32, #tpu.memory_space<vmem>>, vector<64x1xf32>
    %c0_5 = arith.constant 0 : index
    %c3 = arith.constant 3 : index
    %4 = vector.load %arg4[%c0_5, %c3] : memref<64x4xf32, #tpu.memory_space<vmem>>, vector<1x1xf32>
    %c0_6 = arith.constant 0 : index
    %c0_7 = arith.constant 0 : index
    %5 = vector.load %arg2[%c0_6, %c0_7] : memref<64x8xf32, #tpu.memory_space<vmem>>, vector<64x8xf32>
    %cst = arith.constant dense<0.000000e+00> : vector<64x128xf32>
    %6 = tpu.matmul %5, %0, %cst {dimension_numbers = #tpu.dot_dimension_numbers<[1], [1], [0], [0], [0, 0, 1, 0], [], []>} : vector<64x8xf32>, vector<128x8xf32>, vector<64x128xf32> -> vector<64x128xf32>
    %7 = vector.broadcast %1 : vector<64x1xf32> to vector<64x128xf32>
    %8 = arith.addf %6, %7 : vector<64x128xf32>
    %9 = math.tanh %8 : vector<64x128xf32>
    %c0_8 = arith.constant 0 : index
    %c0_9 = arith.constant 0 : index
    %10 = vector.load %arg3[%c0_8, %c0_9] : memref<64x64xf32, #tpu.memory_space<vmem>>, vector<64x64xf32>
    %cst_10 = arith.constant dense<0.000000e+00> : vector<64x128xf32>
    %11 = tpu.matmul %10, %9, %cst_10 {dimension_numbers = #tpu.dot_dimension_numbers<[1], [0], [0], [1], [0, 0, 1, 1], [], []>} : vector<64x64xf32>, vector<64x128xf32>, vector<64x128xf32> -> vector<64x128xf32>
    %12 = vector.broadcast %2 : vector<64x1xf32> to vector<64x128xf32>
    %13 = arith.addf %11, %12 : vector<64x128xf32>
    %14 = math.tanh %13 : vector<64x128xf32>
    %15 = vector.broadcast %3 : vector<64x1xf32> to vector<64x128xf32>
    %16 = arith.mulf %14, %15 : vector<64x128xf32>
    %cst_11 = arith.constant dense<0.000000e+00> : vector<128xf32>
    %17 = vector.multi_reduction <add>, %16, %cst_11 [0] : vector<64x128xf32> to vector<128xf32>
    %18 = vector.shape_cast %17 : vector<128xf32> to vector<1x128xf32>
    %19 = vector.broadcast %4 : vector<1x1xf32> to vector<1x128xf32>
    %20 = arith.addf %18, %19 : vector<1x128xf32>
    %c0_12 = arith.constant 0 : index
    %c0_13 = arith.constant 0 : index
    %21 = vector.load %arg5[%c0_12, %c0_13] : memref<1x128xf32, #tpu.memory_space<vmem>>, vector<1x128xf32>
    tpu.vector_store %arg5[%c0_12, %c0_13], %20 {strides = array<i32>} : memref<1x128xf32, #tpu.memory_space<vmem>>, vector<1x128xf32>,
    return
  }
  func.func @transform_0(%arg0: i32) -> (i32, i32) {
    %c0_i32 = arith.constant 0 : i32
    %c0_i32_0 = arith.constant 0 : i32
    return %arg0, %c0_i32 : i32, i32
  }
  func.func @transform_1(%arg0: i32) -> (i32, i32) {
    %c0_i32 = arith.constant 0 : i32
    %c0_i32_0 = arith.constant 0 : i32
    %c0_i32_1 = arith.constant 0 : i32
    return %c0_i32, %c0_i32_0 : i32, i32
  }
  func.func @transform_2(%arg0: i32) -> (i32, i32) {
    %c0_i32 = arith.constant 0 : i32
    %c0_i32_0 = arith.constant 0 : i32
    %c0_i32_1 = arith.constant 0 : i32
    return %c0_i32, %c0_i32_0 : i32, i32
  }
  func.func @transform_3(%arg0: i32) -> (i32, i32) {
    %c0_i32 = arith.constant 0 : i32
    %c0_i32_0 = arith.constant 0 : i32
    %c0_i32_1 = arith.constant 0 : i32
    return %c0_i32, %c0_i32_0 : i32, i32
  }
  func.func @transform_4(%arg0: i32) -> (i32, i32) {
    %c0_i32 = arith.constant 0 : i32
    %c0_i32_0 = arith.constant 0 : i32
    return %c0_i32, %arg0 : i32, i32
  }
}

</mosaic_0001>

<llo_original>
// kernel: tpu_custom_call.1
$region0: #{tpu_custom_call.1}
  #allocation0 [shape = 'u32[]', space=smem, size = 0x4, offset = 0x4, fixed_abs, tag = 'smem constant byte address 0x4 - core index']
  #allocation1 [shape = 'u32[144,128]{1,0:T(1,128)}', space=vmem, size = 0x12000, scoped, tag = 'internal scratch']
  %s0 = inlined_call_operand.vmem [shape: f32[8,8], index: 0, kind: input, shape index: {}]
  %s1 = inlined_call_operand.vmem [shape: f32[64,8], index: 1, kind: input, shape index: {}]
  %s2 = inlined_call_operand.vmem [shape: f32[64,64], index: 2, kind: input, shape index: {}]
  %s3 = inlined_call_operand.vmem [shape: f32[64,4], index: 3, kind: input, shape index: {}]
  %s4 = inlined_call_operand.hbm [shape: f32[1,8], index: 4, kind: output, shape index: {}]
  %s5 = sld [smem:[#allocation0]]
  $region26: #{tpu_custom_call.1} parent=0
    _
  %s7 = ssub.s32 1, %s5
  %s8 = scalar_select 0, %s7, %s5
  $region1: #{tpu_custom_call.1} parent=0
    #allocation2 [shape = 'u8[512]{0}', space=vmem, size = 0x400, scoped, tag = 'output window, operand 0, single buffered']
    #allocation3 [shape = 's32[1]{0}', space=sflag, size = 0x4, scoped, tag = 'scoped memory for tpu_custom_call.1']
    %9 = vsyncpa [#allocation3], 0
    // Predicated region
    $region2: #{tpu_custom_call.1} parent=1 // pred_check
      _
    $region3: #{tpu_custom_call.1} parent=1 // pred_check_branch
      %11 = sbr.rel (0) target = $region5
    $region4: #{tpu_custom_call.1} parent=1 // pred_region
      _
    $region5: #{tpu_custom_call.1} parent=1 // pred_fallthru
      _
    // Predicated region
    $region6: #{tpu_custom_call.1} parent=1 // pred_check
      _
    $region7: #{tpu_custom_call.1} parent=1 // pred_check_branch
      %13 = sbr.rel (0) target = $region9
    $region8: #{tpu_custom_call.1} parent=1 // pred_region
      _
    $region9: #{tpu_custom_call.1} parent=1 // pred_fallthru
      _
    // Predicated region
    $region10: #{tpu_custom_call.1} parent=1 // pred_check
      _
    $region11: #{tpu_custom_call.1} parent=1 // pred_check_branch
      %15 = sbr.rel (0) target = $region13
    $region12: #{tpu_custom_call.1} parent=1 // pred_region
      _
    $region13: #{tpu_custom_call.1} parent=1 // pred_fallthru
      _
    // Predicated region
    $region14: #{tpu_custom_call.1} parent=1 // pred_check
      _
    $region15: #{tpu_custom_call.1} parent=1 // pred_check_branch
      %17 = sbr.rel (0) target = $region17
    $region16: #{tpu_custom_call.1} parent=1 // pred_region
      _
    $region17: #{tpu_custom_call.1} parent=1 // pred_fallthru
      _
    %v18 = vld [vmem:[%s0] sm:$0xff]
    %v19 = vld [vmem:[%s0 + $0x8] sm:$0xff]
    %v20 = vld [vmem:[%s0 + $0x10] sm:$0xff]
    %v21 = vld [vmem:[%s0 + $0x18] sm:$0xff]
    %v22 = vld [vmem:[%s0 + $0x20] sm:$0xff]
    %v23 = vld [vmem:[%s0 + $0x28] sm:$0xff]
    %v24 = vld [vmem:[%s0 + $0x30] sm:$0xff]
    %v25 = vld [vmem:[%s0 + $0x38] sm:$0xff]
    %v26 = vld [vmem:[%s0 + $0x40] sm:$0xff]
    %v27 = vld [vmem:[%s0 + $0x48] sm:$0xff]
    %v28 = vld [vmem:[%s0 + $0x50] sm:$0xff]
    %v29 = vld [vmem:[%s0 + $0x58] sm:$0xff]
    %v30 = vld [vmem:[%s0 + $0x60] sm:$0xff]
    %v31 = vld [vmem:[%s0 + $0x68] sm:$0xff]
    %v32 = vld [vmem:[%s0 + $0x70] sm:$0xff]
    %v33 = vld [vmem:[%s0 + $0x78] sm:$0xff]
    %v34 = vld [vmem:[%s3] sm:$0xff]
    %v35 = vld [vmem:[%s3 + $0x8] sm:$0xff]
    %v36 = vld [vmem:[%s3 + $0x10] sm:$0xff]
    %v37 = vld [vmem:[%s3 + $0x18] sm:$0xff]
    %v38 = vld [vmem:[%s3 + $0x20] sm:$0xff]
    %v39 = vld [vmem:[%s3 + $0x28] sm:$0xff]
    %v40 = vld [vmem:[%s3 + $0x30] sm:$0xff]
    %v41 = vld [vmem:[%s3 + $0x38] sm:$0xff]
    %v42 = vld [vmem:[%s3] sm:$0x1]
    %v43 = vld [vmem:[%s1] sm:$0xff]
    %v44 = vld [vmem:[%s1 + $0x8] sm:$0xff]
    %v45 = vld [vmem:[%s1 + $0x10] sm:$0xff]
    %v46 = vld [vmem:[%s1 + $0x18] sm:$0xff]
    %v47 = vld [vmem:[%s1 + $0x20] sm:$0xff]
    %v48 = vld [vmem:[%s1 + $0x28] sm:$0xff]
    %v49 = vld [vmem:[%s1 + $0x30] sm:$0xff]
    %v50 = vld [vmem:[%s1 + $0x38] sm:$0xff]
    %52 = vset.pattern.permute.xlu0 0
    %53 = vperm.xlu0 %52, %v34
    %v54 = vpop.permute.xlu0 %53
    %57 = vset.pattern.permute.xlu0 0
    %58 = vperm.xlu0 %57, %v35
    %v59 = vpop.permute.xlu0 %58
    %62 = vset.pattern.permute.xlu0 0
    %63 = vperm.xlu0 %62, %v36
    %v64 = vpop.permute.xlu0 %63
    %67 = vset.pattern.permute.xlu0 0
    %68 = vperm.xlu0 %67, %v37
    %v69 = vpop.permute.xlu0 %68
    %72 = vset.pattern.permute.xlu0 0
    %73 = vperm.xlu0 %72, %v38
    %v74 = vpop.permute.xlu0 %73
    %77 = vset.pattern.permute.xlu0 0
    %78 = vperm.xlu0 %77, %v39
    %v79 = vpop.permute.xlu0 %78
    %82 = vset.pattern.permute.xlu0 0
    %83 = vperm.xlu0 %82, %v40
    %v84 = vpop.permute.xlu0 %83
    %87 = vset.pattern.permute.xlu0 0
    %88 = vperm.xlu0 %87, %v41
    %v89 = vpop.permute.xlu0 %88
    %vm91 = vcmask 64512
    %v93 = vsel %vm91, %v43, 0
    %v96 = vsel %vm91, %v44, 0
    %v99 = vsel %vm91, %v45, 0
    %v102 = vsel %vm91, %v46, 0
    %v105 = vsel %vm91, %v47, 0
    %v108 = vsel %vm91, %v48, 0
    %v111 = vsel %vm91, %v49, 0
    %v114 = vsel %vm91, %v50, 0
    %v117 = vsel %vm91, %v18, 0
    %v120 = vsel %vm91, %v19, 0
    %v123 = vsel %vm91, %v20, 0
    %v126 = vsel %vm91, %v21, 0
    %v129 = vsel %vm91, %v22, 0
    %v132 = vsel %vm91, %v23, 0
    %v135 = vsel %vm91, %v24, 0
    %v138 = vsel %vm91, %v25, 0
    %v141 = vsel %vm91, %v26, 0
    %v144 = vsel %vm91, %v27, 0
    %v147 = vsel %vm91, %v28, 0
    %v150 = vsel %vm91, %v29, 0
    %v153 = vsel %vm91, %v30, 0
    %v156 = vsel %vm91, %v31, 0
    %v159 = vsel %vm91, %v32, 0
    %v162 = vsel %vm91, %v33, 0
    %164 = vmatprep.subr.mxu0 0.0
    %165 = vmatpush1.xpose.msra.mxu0 %v117
    %166 = vmatprep.subr.mxu0 0.0
    %167 = vmatpush1.xpose.msra.mxu0 %v120
    %168 = vmatprep.subr.mxu0 0.0
    %169 = vmatpush1.xpose.msra.mxu0 %v123
    %170 = vmatprep.subr.mxu0 0.0
    %171 = vmatpush1.xpose.msra.mxu0 %v126
    %172 = vmatprep.subr.mxu0 0.0
    %173 = vmatpush1.xpose.msra.mxu0 %v129
    %174 = vmatprep.subr.mxu0 0.0
    %175 = vmatpush1.xpose.msra.mxu0 %v132
    %176 = vmatprep.subr.mxu0 0.0
    %177 = vmatpush1.xpose.msra.mxu0 %v135
    %178 = vmatprep.subr.mxu0 0.0
    %179 = vmatpush1.xpose.msra.mxu0 %v138
    %180 = vmatprep.subr.mxu0 0.0
    %181 = vmatpush1.xpose.msra.mxu0 %v141
    %182 = vmatprep.subr.mxu0 0.0
    %183 = vmatpush1.xpose.msra.mxu0 %v144
    %184 = vmatprep.subr.mxu0 0.0
    %185 = vmatpush1.xpose.msra.mxu0 %v147
    %186 = vmatprep.subr.mxu0 0.0
    %187 = vmatpush1.xpose.msra.mxu0 %v150
    %188 = vmatprep.subr.mxu0 0.0
    %189 = vmatpush1.xpose.msra.mxu0 %v153
    %190 = vmatprep.subr.mxu0 0.0
    %191 = vmatpush1.xpose.msra.mxu0 %v156
    %192 = vmatprep.subr.mxu0 0.0
    %193 = vmatpush1.xpose.msra.mxu0 %v159
    %194 = vmatprep.subr.mxu0 0.0
    %195 = vmatpush1.xpose.msra.mxu0 %v162
    %196 = vmatprep.subr.mxu0 0.0
    %197 = vmatpush1.xpose.msra.mxu0 0.0
    %198 = vmatprep.subr.mxu0 0.0
    %199 = vmatpush1.xpose.msra.mxu0 0.0
    %200 = vmatprep.subr.mxu0 0.0
    %201 = vmatpush1.xpose.msra.mxu0 0.0
    %202 = vmatprep.subr.mxu0 0.0
    %203 = vmatpush1.xpose.msra.mxu0 0.0
    %204 = vmatprep.subr.mxu0 0.0
    %205 = vmatpush1.xpose.msra.mxu0 0.0
    %206 = vmatprep.subr.mxu0 0.0
    %207 = vmatpush1.xpose.msra.mxu0 0.0
    %208 = vmatprep.subr.mxu0 0.0
    %209 = vmatpush1.xpose.msra.mxu0 0.0
    %210 = vmatprep.subr.mxu0 0.0
    %211 = vmatpush1.xpose.msra.mxu0 0.0
    %212 = vmatprep.subr.mxu0 0.0
    %213 = vmatpush1.xpose.msra.mxu0 0.0
    %214 = vmatprep.subr.mxu0 0.0
    %215 = vmatpush1.xpose.msra.mxu0 0.0
    %216 = vmatprep.subr.mxu0 0.0
    %217 = vmatpush1.xpose.msra.mxu0 0.0
    %218 = vmatprep.subr.mxu0 0.0
    %219 = vmatpush1.xpose.msra.mxu0 0.0
    %220 = vmatprep.subr.mxu0 0.0
    %221 = vmatpush1.xpose.msra.mxu0 0.0
    %222 = vmatprep.subr.mxu0 0.0
    %223 = vmatpush1.xpose.msra.mxu0 0.0
    %224 = vmatprep.subr.mxu0 0.0
    %225 = vmatpush1.xpose.msra.mxu0 0.0
    %226 = vmatprep.subr.mxu0 0.0
    %227 = vmatpush1.xpose.msra.mxu0 0.0
    %228 = vmatprep.mubr.f32.mxu0 0.0
    %229 = vmatmul.mubr.f32.gmra.mrb[0].mxu0 %v93
    %v230 = vpop.f32.mrb[0].mxu0
    %v231 = vadd.f32 %v54, %v230
    %v232 = vpop.f32.mrb[0].mxu0
    %233 = vmatprep.mubr.f32.mxu0 0.0
    %234 = vmatmul.mubr.f32.gmra.mrb[0].mxu0 %v96
    %v235 = vpop.f32.mrb[0].mxu0
    %v236 = vadd.f32 %v59, %v235
    %v237 = vpop.f32.mrb[0].mxu0
    %238 = vmatprep.mubr.f32.mxu0 0.0
    %239 = vmatmul.mubr.f32.gmra.mrb[0].mxu0 %v99
    %v240 = vpop.f32.mrb[0].mxu0
    %v241 = vadd.f32 %v64, %v240
    %v242 = vpop.f32.mrb[0].mxu0
    %243 = vmatprep.mubr.f32.mxu0 0.0
    %244 = vmatmul.mubr.f32.gmra.mrb[0].mxu0 %v102
    %v245 = vpop.f32.mrb[0].mxu0
    %v246 = vadd.f32 %v69, %v245
    %v247 = vpop.f32.mrb[0].mxu0
    %248 = vmatprep.mubr.f32.mxu0 0.0
    %249 = vmatmul.mubr.f32.gmra.mrb[0].mxu0 %v105
    %v250 = vpop.f32.mrb[0].mxu0
    %v251 = vadd.f32 %v74, %v250
    %v252 = vpop.f32.mrb[0].mxu0
    %253 = vmatprep.mubr.f32.mxu0 0.0
    %254 = vmatmul.mubr.f32.gmra.mrb[0].mxu0 %v108
    %v255 = vpop.f32.mrb[0].mxu0
    %v256 = vadd.f32 %v79, %v255
    %v257 = vpop.f32.mrb[0].mxu0
    %258 = vmatprep.mubr.f32.mxu0 0.0
    %259 = vmatmul.mubr.f32.gmra.mrb[0].mxu0 %v111
    %v260 = vpop.f32.mrb[0].mxu0
    %v261 = vadd.f32 %v84, %v260
    %v262 = vpop.f32.mrb[0].mxu0
    %263 = vmatprep.mubr.f32.mxu0 0.0
    %264 = vmatmul.mubr.f32.gmra.mrb[0].mxu0 %v114
    %v265 = vpop.f32.mrb[0].mxu0
    %v266 = vadd.f32 %v89, %v265
    %v267 = vpop.f32.mrb[0].mxu0
    %268 = vdwg.mxu0
    %v269 = vtanh.pop %v231
    %v270 = vtanh.pop %v236
    %v271 = vtanh.pop %v241
    %v272 = vtanh.pop %v246
    %v273 = vtanh.pop %v251
    %v274 = vtanh.pop %v256
    %v275 = vtanh.pop %v261
    %v276 = vtanh.pop %v266
    %v277 = vld [vmem:[%s2] sm:$0xff]
    %v278 = vld [vmem:[%s2 + $0x8] sm:$0xff]
    %v279 = vld [vmem:[%s2 + $0x10] sm:$0xff]
    %v280 = vld [vmem:[%s2 + $0x18] sm:$0xff]
    %v281 = vld [vmem:[%s2 + $0x20] sm:$0xff]
    %v282 = vld [vmem:[%s2 + $0x28] sm:$0xff]
    %v283 = vld [vmem:[%s2 + $0x30] sm:$0xff]
    %v284 = vld [vmem:[%s2 + $0x38] sm:$0xff]
    %285 = vset.pattern.permute.xlu0 1
    %286 = vperm.xlu0 %285, %v34
    %v287 = vpop.permute.xlu0 %286
    %289 = vset.pattern.permute.xlu0 1
    %290 = vperm.xlu0 %289, %v35
    %v291 = vpop.permute.xlu0 %290
    %293 = vset.pattern.permute.xlu0 1
    %294 = vperm.xlu0 %293, %v36
    %v295 = vpop.permute.xlu0 %294
    %297 = vset.pattern.permute.xlu0 1
    %298 = vperm.xlu0 %297, %v37
    %v299 = vpop.permute.xlu0 %298
    %301 = vset.pattern.permute.xlu0 1
    %302 = vperm.xlu0 %301, %v38
    %v303 = vpop.permute.xlu0 %302
    %305 = vset.pattern.permute.xlu0 1
    %306 = vperm.xlu0 %305, %v39
    %v307 = vpop.permute.xlu0 %306
    %309 = vset.pattern.permute.xlu0 1
    %310 = vperm.xlu0 %309, %v40
    %v311 = vpop.permute.xlu0 %310
    %313 = vset.pattern.permute.xlu0 1
    %314 = vperm.xlu0 %313, %v41
    %v315 = vpop.permute.xlu0 %314
    %vm317 = vcmask 523264
    %v319 = vsel %vm317, %v277, 0
    %v322 = vsel %vm317, %v278, 0
    %v325 = vsel %vm317, %v279, 0
    %v328 = vsel %vm317, %v280, 0
    %v331 = vsel %vm317, %v281, 0
    %v334 = vsel %vm317, %v282, 0
    %v337 = vsel %vm317, %v283, 0
    %v340 = vsel %vm317, %v284, 0
    %342 = vmatprep.subr.mxu0 0.0
    %343 = vmatpush1.msra.mxu0 %v269
    %344 = vmatprep.subr.mxu0 0.0
    %345 = vmatpush1.msra.mxu0 %v270
    %346 = vmatprep.subr.mxu0 0.0
    %347 = vmatpush1.msra.mxu0 %v271
    %348 = vmatprep.subr.mxu0 0.0
    %349 = vmatpush1.msra.mxu0 %v272
    %350 = vmatprep.subr.mxu0 0.0
    %351 = vmatpush1.msra.mxu0 %v273
    %352 = vmatprep.subr.mxu0 0.0
    %353 = vmatpush1.msra.mxu0 %v274
    %354 = vmatprep.subr.mxu0 0.0
    %355 = vmatpush1.msra.mxu0 %v275
    %356 = vmatprep.subr.mxu0 0.0
    %357 = vmatpush1.msra.mxu0 %v276
    %358 = vmatprep.subr.mxu0 0.0
    %359 = vmatpush1.msra.mxu0 0.0
    %360 = vmatprep.subr.mxu0 0.0
    %361 = vmatpush1.msra.mxu0 0.0
    %362 = vmatprep.subr.mxu0 0.0
    %363 = vmatpush1.msra.mxu0 0.0
    %364 = vmatprep.subr.mxu0 0.0
    %365 = vmatpush1.msra.mxu0 0.0
    %366 = vmatprep.subr.mxu0 0.0
    %367 = vmatpush1.msra.mxu0 0.0
    %368 = vmatprep.subr.mxu0 0.0
    %369 = vmatpush1.msra.mxu0 0.0
    %370 = vmatprep.subr.mxu0 0.0
    %371 = vmatpush1.msra.mxu0 0.0
    %372 = vmatprep.subr.mxu0 0.0
    %373 = vmatpush1.msra.mxu0 0.0
    %374 = vmatprep.subr.mxu0 0.0
    %375 = vmatpush1.msra.mxu0 0.0
    %376 = vmatprep.subr.mxu0 0.0
    %377 = vmatpush1.msra.mxu0 0.0
    %378 = vmatprep.subr.mxu0 0.0
    %379 = vmatpush1.msra.mxu0 0.0
    %380 = vmatprep.subr.mxu0 0.0
    %381 = vmatpush1.msra.mxu0 0.0
    %382 = vmatprep.subr.mxu0 0.0
    %383 = vmatpush1.msra.mxu0 0.0
    %384 = vmatprep.subr.mxu0 0.0
    %385 = vmatpush1.msra.mxu0 0.0
    %386 = vmatprep.subr.mxu0 0.0
    %387 = vmatpush1.msra.mxu0 0.0
    %388 = vmatprep.subr.mxu0 0.0
    %389 = vmatpush1.msra.mxu0 0.0
    %390 = vmatprep.subr.mxu0 0.0
    %391 = vmatpush1.msra.mxu0 0.0
    %392 = vmatprep.subr.mxu0 0.0
    %393 = vmatpush1.msra.mxu0 0.0
    %394 = vmatprep.subr.mxu0 0.0
    %395 = vmatpush1.msra.mxu0 0.0
    %396 = vmatprep.subr.mxu0 0.0
    %397 = vmatpush1.msra.mxu0 0.0
    %398 = vmatprep.subr.mxu0 0.0
    %399 = vmatpush1.msra.mxu0 0.0
    %400 = vmatprep.subr.mxu0 0.0
    %401 = vmatpush1.msra.mxu0 0.0
    %402 = vmatprep.subr.mxu0 0.0
    %403 = vmatpush1.msra.mxu0 0.0
    %404 = vmatprep.subr.mxu0 0.0
    %405 = vmatpush1.msra.mxu0 0.0
    %406 = vmatprep.mubr.f32.mxu0 0.0
    %407 = vmatmul.mubr.f32.gmra.mrb[0].mxu0 %v319
    %v408 = vpop.f32.mrb[0].mxu0
    %v409 = vadd.f32 %v287, %v408
    %v410 = vpop.f32.mrb[0].mxu0
    %411 = vmatprep.mubr.f32.mxu0 0.0
    %412 = vmatmul.mubr.f32.gmra.mrb[0].mxu0 %v322
    %v413 = vpop.f32.mrb[0].mxu0
    %v414 = vadd.f32 %v291, %v413
    %v415 = vpop.f32.mrb[0].mxu0
    %416 = vmatprep.mubr.f32.mxu0 0.0
    %417 = vmatmul.mubr.f32.gmra.mrb[0].mxu0 %v325
    %v418 = vpop.f32.mrb[0].mxu0
    %v419 = vadd.f32 %v295, %v418
    %v420 = vpop.f32.mrb[0].mxu0
    %421 = vmatprep.mubr.f32.mxu0 0.0
    %422 = vmatmul.mubr.f32.gmra.mrb[0].mxu0 %v328
    %v423 = vpop.f32.mrb[0].mxu0
    %v424 = vadd.f32 %v299, %v423
    %v425 = vpop.f32.mrb[0].mxu0
    %426 = vmatprep.mubr.f32.mxu0 0.0
    %427 = vmatmul.mubr.f32.gmra.mrb[0].mxu0 %v331
    %v428 = vpop.f32.mrb[0].mxu0
    %v429 = vadd.f32 %v303, %v428
    %v430 = vpop.f32.mrb[0].mxu0
    %431 = vmatprep.mubr.f32.mxu0 0.0
    %432 = vmatmul.mubr.f32.gmra.mrb[0].mxu0 %v334
    %v433 = vpop.f32.mrb[0].mxu0
    %v434 = vadd.f32 %v307, %v433
    %v435 = vpop.f32.mrb[0].mxu0
    %436 = vmatprep.mubr.f32.mxu0 0.0
    %437 = vmatmul.mubr.f32.gmra.mrb[0].mxu0 %v337
    %v438 = vpop.f32.mrb[0].mxu0
    %v439 = vadd.f32 %v311, %v438
    %v440 = vpop.f32.mrb[0].mxu0
    %441 = vmatprep.mubr.f32.mxu0 0.0
    %442 = vmatmul.mubr.f32.gmra.mrb[0].mxu0 %v340
    %v443 = vpop.f32.mrb[0].mxu0
    %v444 = vadd.f32 %v315, %v443
    %v445 = vpop.f32.mrb[0].mxu0
    %446 = vdwg.mxu0
    %v447 = vtanh.pop %v409
    %v448 = vtanh.pop %v414
    %v449 = vtanh.pop %v419
    %v450 = vtanh.pop %v424
    %v451 = vtanh.pop %v429
    %v452 = vtanh.pop %v434
    %v453 = vtanh.pop %v439
    %v454 = vtanh.pop %v444
    %455 = vset.pattern.permute.xlu0 2
    %456 = vperm.xlu0 %455, %v34
    %v457 = vpop.permute.xlu0 %456
    %459 = vset.pattern.permute.xlu0 2
    %460 = vperm.xlu0 %459, %v35
    %v461 = vpop.permute.xlu0 %460
    %463 = vset.pattern.permute.xlu0 2
    %464 = vperm.xlu0 %463, %v36
    %v465 = vpop.permute.xlu0 %464
    %467 = vset.pattern.permute.xlu0 2
    %468 = vperm.xlu0 %467, %v37
    %v469 = vpop.permute.xlu0 %468
    %471 = vset.pattern.permute.xlu0 2
    %472 = vperm.xlu0 %471, %v38
    %v473 = vpop.permute.xlu0 %472
    %475 = vset.pattern.permute.xlu0 2
    %476 = vperm.xlu0 %475, %v39
    %v477 = vpop.permute.xlu0 %476
    %479 = vset.pattern.permute.xlu0 2
    %480 = vperm.xlu0 %479, %v40
    %v481 = vpop.permute.xlu0 %480
    %483 = vset.pattern.permute.xlu0 2
    %484 = vperm.xlu0 %483, %v41
    %v485 = vpop.permute.xlu0 %484
    %v487 = vmul.f32 %v447, %v457
    %v488 = vmul.f32 %v448, %v461
    %v489 = vmul.f32 %v449, %v465
    %v490 = vmul.f32 %v450, %v469
    %v491 = vmul.f32 %v451, %v473
    %v492 = vmul.f32 %v452, %v477
    %v493 = vmul.f32 %v453, %v481
    %v494 = vmul.f32 %v454, %v485
    %v495 = vadd.f32 %v487, %v488
    %v496 = vadd.f32 %v495, %v489
    %v497 = vadd.f32 %v496, %v490
    %v498 = vadd.f32 %v497, %v491
    %v499 = vadd.f32 %v498, %v492
    %v500 = vadd.f32 %v499, %v493
    %v501 = vadd.f32 %v500, %v494
    %v502 = vrot.slane %v501, 4
    %v503 = vadd.f32 %v501, %v502
    %v504 = vrot.slane %v503, 2
    %v505 = vadd.f32 %v503, %v504
    %v506 = vrot.slane %v505, 1
    %v507 = vadd.f32 %v505, %v506
    %509 = vset.pattern.permute.xlu0 3
    %510 = vperm.xlu0 %509, %v42
    %v511 = vpop.permute.xlu0 %510
    %v513 = vadd.f32 %v507, %v511
    %514 = vst [vmem:[#allocation2] sm:$0x1] %v513
    // Predicated region
    $region18: #{tpu_custom_call.1} parent=1 // pred_check
      _
    $region19: #{tpu_custom_call.1} parent=1 // pred_check_branch
      %516 = sbr.rel (0) target = $region21
    $region20: #{tpu_custom_call.1} parent=1 // pred_region
      %s518 = ssub.s32 16, 16
      %519 = vsyncadd [#allocation3], %s518
      %s521 = sshll.u32 [#allocation2], 4
      %s522 = int_to_ptr.vmem [resolvable:$true] %s521
      %524 = dma.vmem_to_hbm [thread:$0]  %s522, 16, %s4, [#allocation3]
    $region21: #{tpu_custom_call.1} parent=1 // pred_fallthru
      _
    // Predicated region
    $region22: #{tpu_custom_call.1} parent=1 // pred_check
      _
    $region23: #{tpu_custom_call.1} parent=1 // pred_check_branch
      %526 = sbr.rel (0) target = $region25
    $region24: #{tpu_custom_call.1} parent=1 // pred_region
      %527 = dma.done [#allocation3], 16
    $region25: #{tpu_custom_call.1} parent=1 // pred_fallthru
      _
    %528 = vsyncpa [#allocation3], 1

</llo_original>
